<compile_context>
chip_gen: v7x
topology: tpu7x:2x2x1
jax: 0.10.0
libtpu: 0.0.40
codegen_flags: <defaults>
</compile_context>

<pallas_src>
import jax
import jax.numpy as jnp
from jax.experimental import pallas as pl
from jax.experimental.pallas import tpu as pltpu

LANE = 128
N_LAYERS = 4


def _round_up(n, m):
    return (n + m - 1) // m * m


def _block_kernel(x_ref, w_ref, b_ref, o_ref):
    """x_ref: [TB, D]; w_ref: [4, D, D]; b_ref: [4, 1, D]; o_ref: [TB, D]."""
    h = x_ref[...]
    # Unrolled 4 x (Linear -> ReLU).  Weights/biases are VMEM-resident across
    # all batch tiles (constant index_map); biases hoisted once per layer.
    for layer in range(N_LAYERS):
        w = w_ref[layer]                     # [D, D]
        b = b_ref[layer]                     # [1, D]
        h = jnp.dot(h, w, preferred_element_type=jnp.float32) + b
        h = jnp.maximum(h, 0.0)
    o_ref[...] = h.astype(o_ref.dtype)


def block_forward(x, params, *, batch_tile=128):
    """Forward pass of Block.

    x: [B, backcast_length] float32.
    params: dict with w1..w4 stored transposed [in, out] and b1..b4 as [out].
    Returns [B, units] float32.
    """
    B, backcast_length = x.shape
    units = params["w1"].shape[1]

    # Pad every feature dim to a single lane-width-aligned size D so one
    # square [4, D, D] weight slab covers fc1..fc4.
    D = max(_round_up(backcast_length, LANE), _round_up(units, LANE))

    # Batch tile: 128 rows for realistic batches, otherwise the (8-aligned)
    # padded batch itself.  v7x note: resident weights + double-buffered
    # (TB, D) tiles are well under the 32 MiB scoped / 64 MiB physical VMEM.
    TB = batch_tile if B >= batch_tile else _round_up(max(B, 1), 8)
    B_pad = _round_up(B, TB)

    def pad_w(w):  # [in, out] -> [D, D], zero padded
        return jnp.zeros((D, D), jnp.float32).at[: w.shape[0], : w.shape[1]].set(w)

    def pad_b(b):  # [out] -> [1, D], zero padded
        b = jnp.reshape(b, (1, -1))
        return jnp.zeros((1, D), jnp.float32).at[:, : b.shape[1]].set(b)

    w_slab = jnp.stack([pad_w(params[k]) for k in ("w1", "w2", "w3", "w4")])
    b_slab = jnp.stack([pad_b(params[k]) for k in ("b1", "b2", "b3", "b4")])
    x_pad = jnp.zeros((B_pad, D), jnp.float32).at[:B, :backcast_length].set(x)

    out = pl.pallas_call(
        _block_kernel,
        out_shape=jax.ShapeDtypeStruct((B_pad, D), jnp.float32),
        grid=(B_pad // TB,),
        in_specs=[
            pl.BlockSpec((TB, D), lambda i: (i, 0)),                 # x tile (pipelined)
            pl.BlockSpec((N_LAYERS, D, D), lambda i: (0, 0, 0)),     # weights (resident)
            pl.BlockSpec((N_LAYERS, 1, D), lambda i: (0, 0, 0)),     # biases (resident)
        ],
        out_specs=pl.BlockSpec((TB, D), lambda i: (i, 0)),
        compiler_params=pltpu.CompilerParams(
            dimension_semantics=("parallel",),
        ),
    )(x_pad, w_slab, b_slab)

    return out[:B, :units]


def make_params(key, units, backcast_length):
    """Deterministic synthetic parameters. Weights stored transposed: [in, out]."""
    def linear_params(k, fan_in, fan_out):
        kw, kb = jax.random.split(k)
        bound = 1.0 / jnp.sqrt(jnp.float32(fan_in))
        w_t = jax.random.uniform(kw, (fan_in, fan_out), jnp.float32, -bound, bound)
        b = jax.random.uniform(kb, (fan_out,), jnp.float32, -bound, bound)
        return w_t, b

    keys = jax.random.split(key, 4)
    p = {}
    p["w1"], p["b1"] = linear_params(keys[0], backcast_length, units)  # fc1
    p["w2"], p["b2"] = linear_params(keys[1], units, units)            # fc2
    p["w3"], p["b3"] = linear_params(keys[2], units, units)            # fc3
    p["w4"], p["b4"] = linear_params(keys[3], units, units)            # fc4
    return p


def reference_forward(x, p):
    """Pure-JAX reference (matches Block.forward)."""
    relu = lambda h: jnp.maximum(h, 0.0)
    h = relu(x @ p["w1"] + p["b1"])
    h = relu(h @ p["w2"] + p["b2"])
    h = relu(h @ p["w3"] + p["b3"])
    h = relu(h @ p["w4"] + p["b4"])
    return h


if __name__ == "__main__":
    units = 32
    backcast_length = 10
    batch = 8

    key = jax.random.PRNGKey(0)
    kx, kp = jax.random.split(key)
    x = jax.random.normal(kx, (batch, backcast_length), jnp.float32)
    params = make_params(kp, units, backcast_length)

    out = jax.block_until_ready(block_forward(x, params))

    ref = reference_forward(x, params)
    assert out.shape == (batch, units)
    assert jnp.allclose(out, ref, atol=1e-5, rtol=1e-5)

    print("KERNEL_OK")
</pallas_src>

<mosaic_0001>
module attributes {stable_mosaic.version = 11 : i64} {
  func.func @_block_kernel(%arg0: i32, %arg1: memref<8x128xf32, #tpu.memory_space<vmem>>, %arg2: memref<4x128x128xf32, #tpu.memory_space<vmem>>, %arg3: memref<4x1x128xf32, #tpu.memory_space<vmem>>, %arg4: memref<8x128xf32, #tpu.memory_space<vmem>>) attributes {dimension_semantics = [#tpu.dimension_semantics<parallel>], iteration_bounds = array<i64: 1>, scalar_prefetch = 0 : i64, scratch_operands = 0 : i64, tpu.core_type = #tpu.core_type<tc>, window_params = [{transform_indices = @transform_0, window_bounds = array<i64: 8, 128>}, {pipeline_mode = #tpu.pipeline_mode<synchronous>, transform_indices = @transform_1, window_bounds = array<i64: 4, 128, 128>}, {pipeline_mode = #tpu.pipeline_mode<synchronous>, transform_indices = @transform_2, window_bounds = array<i64: 4, 1, 128>}, {transform_indices = @transform_3, window_bounds = array<i64: 8, 128>}]} {
    %c0 = arith.constant 0 : index
    %c0_0 = arith.constant 0 : index
    %0 = vector.load %arg1[%c0, %c0_0] : memref<8x128xf32, #tpu.memory_space<vmem>>, vector<8x128xf32>
    %c0_1 = arith.constant 0 : index
    %c0_2 = arith.constant 0 : index
    %c0_3 = arith.constant 0 : index
    %1 = vector.load %arg2[%c0_1, %c0_2, %c0_3] : memref<4x128x128xf32, #tpu.memory_space<vmem>>, vector<1x128x128xf32>
    %2 = vector.shape_cast %1 : vector<1x128x128xf32> to vector<128x128xf32>
    %c0_4 = arith.constant 0 : index
    %c0_5 = arith.constant 0 : index
    %c0_6 = arith.constant 0 : index
    %3 = vector.load %arg3[%c0_4, %c0_5, %c0_6] : memref<4x1x128xf32, #tpu.memory_space<vmem>>, vector<1x1x128xf32>
    %4 = vector.shape_cast %3 : vector<1x1x128xf32> to vector<1x128xf32>
    %cst = arith.constant dense<0.000000e+00> : vector<8x128xf32>
    %5 = tpu.matmul %0, %2, %cst {dimension_numbers = #tpu.dot_dimension_numbers<[1], [0], [0], [1], [0, 0, 1, 1], [], []>} : vector<8x128xf32>, vector<128x128xf32>, vector<8x128xf32> -> vector<8x128xf32>
    %6 = vector.broadcast %4 : vector<1x128xf32> to vector<8x128xf32>
    %7 = arith.addf %5, %6 : vector<8x128xf32>
    %cst_7 = arith.constant 0.000000e+00 : f32
    %8 = vector.broadcast %cst_7 : f32 to vector<8x128xf32>
    %9 = arith.maximumf %7, %8 : vector<8x128xf32>
    %c1 = arith.constant 1 : index
    %c0_8 = arith.constant 0 : index
    %c0_9 = arith.constant 0 : index
    %10 = vector.load %arg2[%c1, %c0_8, %c0_9] : memref<4x128x128xf32, #tpu.memory_space<vmem>>, vector<1x128x128xf32>
    %11 = vector.shape_cast %10 : vector<1x128x128xf32> to vector<128x128xf32>
    %c1_10 = arith.constant 1 : index
    %c0_11 = arith.constant 0 : index
    %c0_12 = arith.constant 0 : index
    %12 = vector.load %arg3[%c1_10, %c0_11, %c0_12] : memref<4x1x128xf32, #tpu.memory_space<vmem>>, vector<1x1x128xf32>
    %13 = vector.shape_cast %12 : vector<1x1x128xf32> to vector<1x128xf32>
    %cst_13 = arith.constant dense<0.000000e+00> : vector<8x128xf32>
    %14 = tpu.matmul %9, %11, %cst_13 {dimension_numbers = #tpu.dot_dimension_numbers<[1], [0], [0], [1], [0, 0, 1, 1], [], []>} : vector<8x128xf32>, vector<128x128xf32>, vector<8x128xf32> -> vector<8x128xf32>
    %15 = vector.broadcast %13 : vector<1x128xf32> to vector<8x128xf32>
    %16 = arith.addf %14, %15 : vector<8x128xf32>
    %cst_14 = arith.constant 0.000000e+00 : f32
    %17 = vector.broadcast %cst_14 : f32 to vector<8x128xf32>
    %18 = arith.maximumf %16, %17 : vector<8x128xf32>
    %c2 = arith.constant 2 : index
    %c0_15 = arith.constant 0 : index
    %c0_16 = arith.constant 0 : index
    %19 = vector.load %arg2[%c2, %c0_15, %c0_16] : memref<4x128x128xf32, #tpu.memory_space<vmem>>, vector<1x128x128xf32>
    %20 = vector.shape_cast %19 : vector<1x128x128xf32> to vector<128x128xf32>
    %c2_17 = arith.constant 2 : index
    %c0_18 = arith.constant 0 : index
    %c0_19 = arith.constant 0 : index
    %21 = vector.load %arg3[%c2_17, %c0_18, %c0_19] : memref<4x1x128xf32, #tpu.memory_space<vmem>>, vector<1x1x128xf32>
    %22 = vector.shape_cast %21 : vector<1x1x128xf32> to vector<1x128xf32>
    %cst_20 = arith.constant dense<0.000000e+00> : vector<8x128xf32>
    %23 = tpu.matmul %18, %20, %cst_20 {dimension_numbers = #tpu.dot_dimension_numbers<[1], [0], [0], [1], [0, 0, 1, 1], [], []>} : vector<8x128xf32>, vector<128x128xf32>, vector<8x128xf32> -> vector<8x128xf32>
    %24 = vector.broadcast %22 : vector<1x128xf32> to vector<8x128xf32>
    %25 = arith.addf %23, %24 : vector<8x128xf32>
    %cst_21 = arith.constant 0.000000e+00 : f32
    %26 = vector.broadcast %cst_21 : f32 to vector<8x128xf32>
    %27 = arith.maximumf %25, %26 : vector<8x128xf32>
    %c3 = arith.constant 3 : index
    %c0_22 = arith.constant 0 : index
    %c0_23 = arith.constant 0 : index
    %28 = vector.load %arg2[%c3, %c0_22, %c0_23] : memref<4x128x128xf32, #tpu.memory_space<vmem>>, vector<1x128x128xf32>
    %29 = vector.shape_cast %28 : vector<1x128x128xf32> to vector<128x128xf32>
    %c3_24 = arith.constant 3 : index
    %c0_25 = arith.constant 0 : index
    %c0_26 = arith.constant 0 : index
    %30 = vector.load %arg3[%c3_24, %c0_25, %c0_26] : memref<4x1x128xf32, #tpu.memory_space<vmem>>, vector<1x1x128xf32>
    %31 = vector.shape_cast %30 : vector<1x1x128xf32> to vector<1x128xf32>
    %cst_27 = arith.constant dense<0.000000e+00> : vector<8x128xf32>
    %32 = tpu.matmul %27, %29, %cst_27 {dimension_numbers = #tpu.dot_dimension_numbers<[1], [0], [0], [1], [0, 0, 1, 1], [], []>} : vector<8x128xf32>, vector<128x128xf32>, vector<8x128xf32> -> vector<8x128xf32>
    %33 = vector.broadcast %31 : vector<1x128xf32> to vector<8x128xf32>
    %34 = arith.addf %32, %33 : vector<8x128xf32>
    %cst_28 = arith.constant 0.000000e+00 : f32
    %35 = vector.broadcast %cst_28 : f32 to vector<8x128xf32>
    %36 = arith.maximumf %34, %35 : vector<8x128xf32>
    %c0_29 = arith.constant 0 : index
    %c0_30 = arith.constant 0 : index
    %37 = vector.load %arg4[%c0_29, %c0_30] : memref<8x128xf32, #tpu.memory_space<vmem>>, vector<8x128xf32>
    tpu.vector_store %arg4[%c0_29, %c0_30], %36 {strides = array<i32>} : memref<8x128xf32, #tpu.memory_space<vmem>>, vector<8x128xf32>,
    return
  }
  func.func @transform_0(%arg0: i32) -> (i32, i32) {
    %c0_i32 = arith.constant 0 : i32
    %c0_i32_0 = arith.constant 0 : i32
    return %arg0, %c0_i32 : i32, i32
  }
  func.func @transform_1(%arg0: i32) -> (i32, i32, i32) {
    %c0_i32 = arith.constant 0 : i32
    %c0_i32_0 = arith.constant 0 : i32
    %c0_i32_1 = arith.constant 0 : i32
    %c0_i32_2 = arith.constant 0 : i32
    return %c0_i32, %c0_i32_0, %c0_i32_1 : i32, i32, i32
  }
  func.func @transform_2(%arg0: i32) -> (i32, i32, i32) {
    %c0_i32 = arith.constant 0 : i32
    %c0_i32_0 = arith.constant 0 : i32
    %c0_i32_1 = arith.constant 0 : i32
    %c0_i32_2 = arith.constant 0 : i32
    return %c0_i32, %c0_i32_0, %c0_i32_1 : i32, i32, i32
  }
  func.func @transform_3(%arg0: i32) -> (i32, i32) {
    %c0_i32 = arith.constant 0 : i32
    %c0_i32_0 = arith.constant 0 : i32
    return %arg0, %c0_i32 : i32, i32
  }
}

</mosaic_0001>

<llo_original>
// kernel: tpu_custom_call.1
$region0: #{tpu_custom_call.1}
  #allocation0 [shape = 'u32[]', space=smem, size = 0x4, offset = 0x4, fixed_abs, tag = 'smem constant byte address 0x4 - core index']
  #allocation1 [shape = 'u32[144,128]{1,0:T(1,128)}', space=vmem, size = 0x12000, scoped, tag = 'internal scratch']
  %s0 = inlined_call_operand.hbm [shape: f32[8,128], index: 0, kind: input, shape index: {}]
  %s1 = inlined_call_operand.hbm [shape: f32[4,128,128], index: 1, kind: input, shape index: {}]
  %s2 = inlined_call_operand.vmem [shape: f32[4,1,128], index: 2, kind: input, shape index: {}]
  %s3 = inlined_call_operand.hbm [shape: f32[8,128], index: 3, kind: output, shape index: {}]
  %s4 = sld [smem:[#allocation0]]
  $region30: #{tpu_custom_call.1} parent=0
    _
  %s6 = ssub.s32 1, %s4
  %s7 = scalar_select 0, %s6, %s4
  $region1: #{tpu_custom_call.1} parent=0
    #allocation2 [shape = 'u8[4096]{0}', space=vmem, size = 0x1000, scoped, tag = 'input window, operand 0, single buffered']
    #allocation3 [shape = 's32[1]{0}', space=sflag, size = 0x4, scoped, tag = 'scoped memory for tpu_custom_call.1']
    #allocation4 [shape = 's32[1]{0}', space=sflag, size = 0x4, scoped, tag = 'scoped memory for tpu_custom_call.1']
    #allocation5 [shape = 'u8[262144]{0}', space=vmem, size = 0x40000, scoped, tag = 'input window, operand 1, single buffered']
    #allocation6 [shape = 's32[1]{0}', space=sflag, size = 0x4, scoped, tag = 'scoped memory for tpu_custom_call.1']
    #allocation7 [shape = 'u8[4096]{0}', space=vmem, size = 0x1000, scoped, tag = 'output window, operand 0, single buffered']
    %8 = vsyncpa [#allocation3], 0
    %9 = vsyncpa [#allocation6], 0
    %10 = vsyncpa [#allocation4], 0
    // Predicated region
    $region2: #{tpu_custom_call.1} parent=1 // pred_check
      _
    $region3: #{tpu_custom_call.1} parent=1 // pred_check_branch
      %12 = sbr.rel (0) target = $region5
    $region4: #{tpu_custom_call.1} parent=1 // pred_region
      %s14 = ssub.s32 128, 128
      %15 = vsyncadd [#allocation3], %s14
      %s17 = sshll.u32 [#allocation2], 4
      %s18 = int_to_ptr.vmem [resolvable:$true] %s17
      %20 = dma.hbm_to_vmem [thread:$0]  %s0, 128, %s18, [#allocation3]
    $region5: #{tpu_custom_call.1} parent=1 // pred_fallthru
      _
    // Predicated region
    $region6: #{tpu_custom_call.1} parent=1 // pred_check
      _
    $region7: #{tpu_custom_call.1} parent=1 // pred_check_branch
      %22 = sbr.rel (0) target = $region9
    $region8: #{tpu_custom_call.1} parent=1 // pred_region
      %s24 = ssub.s32 8192, 8192
      %25 = vsyncadd [#allocation6], %s24
      %s26 = sshll.u32 [#allocation5], 4
      %s27 = int_to_ptr.vmem [resolvable:$true] %s26
      %32 = dma.hbm_to_vmem [thread:$0]  %s1, 8192, %s27, [#allocation6], 128, 128, 8
    $region9: #{tpu_custom_call.1} parent=1 // pred_fallthru
      _
    // Predicated region
    $region10: #{tpu_custom_call.1} parent=1 // pred_check
      _
    $region11: #{tpu_custom_call.1} parent=1 // pred_check_branch
      %34 = sbr.rel (0) target = $region13
    $region12: #{tpu_custom_call.1} parent=1 // pred_region
      _
    $region13: #{tpu_custom_call.1} parent=1 // pred_fallthru
      _
    // Predicated region
    $region14: #{tpu_custom_call.1} parent=1 // pred_check
      _
    $region15: #{tpu_custom_call.1} parent=1 // pred_check_branch
      %36 = sbr.rel (0) target = $region17
    $region16: #{tpu_custom_call.1} parent=1 // pred_region
      %37 = dma.done [#allocation3], 128
    $region17: #{tpu_custom_call.1} parent=1 // pred_fallthru
      _
    // Predicated region
    $region18: #{tpu_custom_call.1} parent=1 // pred_check
      _
    $region19: #{tpu_custom_call.1} parent=1 // pred_check_branch
      %39 = sbr.rel (0) target = $region21
    $region20: #{tpu_custom_call.1} parent=1 // pred_region
      %40 = dma.done [#allocation6], 8192
    $region21: #{tpu_custom_call.1} parent=1 // pred_fallthru
      _
    %v41 = vld [vmem:[#allocation2] sm:$0xff]
    %v42 = vld [vmem:[#allocation5] sm:$0xff]
    %v43 = vld [vmem:[#allocation5 + $0x8] sm:$0xff]
    %v44 = vld [vmem:[#allocation5 + $0x10] sm:$0xff]
    %v45 = vld [vmem:[#allocation5 + $0x18] sm:$0xff]
    %v46 = vld [vmem:[#allocation5 + $0x20] sm:$0xff]
    %v47 = vld [vmem:[#allocation5 + $0x28] sm:$0xff]
    %v48 = vld [vmem:[#allocation5 + $0x30] sm:$0xff]
    %v49 = vld [vmem:[#allocation5 + $0x38] sm:$0xff]
    %v50 = vld [vmem:[#allocation5 + $0x40] sm:$0xff]
    %v51 = vld [vmem:[#allocation5 + $0x48] sm:$0xff]
    %v52 = vld [vmem:[#allocation5 + $0x50] sm:$0xff]
    %v53 = vld [vmem:[#allocation5 + $0x58] sm:$0xff]
    %v54 = vld [vmem:[#allocation5 + $0x60] sm:$0xff]
    %v55 = vld [vmem:[#allocation5 + $0x68] sm:$0xff]
    %v56 = vld [vmem:[#allocation5 + $0x70] sm:$0xff]
    %v57 = vld [vmem:[#allocation5 + $0x78] sm:$0xff]
    %v58 = vld [vmem:[%s2] sm:$0x1]
    %v60 = vlaneseq
    %v61 = vshrl.u32 %v60, 7
    %v62 = vsub.s32 0, %v61
    %v63 = vrot.slane %v58, %v62
    %65 = vmatprep.subr.mxu0 0.0
    %66 = vmatpush1.msra.mxu0 %v42
    %67 = vmatprep.subr.mxu0 0.0
    %68 = vmatpush1.msra.mxu0 %v43
    %69 = vmatprep.subr.mxu0 0.0
    %70 = vmatpush1.msra.mxu0 %v44
    %71 = vmatprep.subr.mxu0 0.0
    %72 = vmatpush1.msra.mxu0 %v45
    %73 = vmatprep.subr.mxu0 0.0
    %74 = vmatpush1.msra.mxu0 %v46
    %75 = vmatprep.subr.mxu0 0.0
    %76 = vmatpush1.msra.mxu0 %v47
    %77 = vmatprep.subr.mxu0 0.0
    %78 = vmatpush1.msra.mxu0 %v48
    %79 = vmatprep.subr.mxu0 0.0
    %80 = vmatpush1.msra.mxu0 %v49
    %81 = vmatprep.subr.mxu0 0.0
    %82 = vmatpush1.msra.mxu0 %v50
    %83 = vmatprep.subr.mxu0 0.0
    %84 = vmatpush1.msra.mxu0 %v51
    %85 = vmatprep.subr.mxu0 0.0
    %86 = vmatpush1.msra.mxu0 %v52
    %87 = vmatprep.subr.mxu0 0.0
    %88 = vmatpush1.msra.mxu0 %v53
    %89 = vmatprep.subr.mxu0 0.0
    %90 = vmatpush1.msra.mxu0 %v54
    %91 = vmatprep.subr.mxu0 0.0
    %92 = vmatpush1.msra.mxu0 %v55
    %93 = vmatprep.subr.mxu0 0.0
    %94 = vmatpush1.msra.mxu0 %v56
    %95 = vmatprep.subr.mxu0 0.0
    %96 = vmatpush1.msra.mxu0 %v57
    %97 = vmatprep.subr.mxu0 0.0
    %98 = vmatpush1.msra.mxu0 0.0
    %99 = vmatprep.subr.mxu0 0.0
    %100 = vmatpush1.msra.mxu0 0.0
    %101 = vmatprep.subr.mxu0 0.0
    %102 = vmatpush1.msra.mxu0 0.0
    %103 = vmatprep.subr.mxu0 0.0
    %104 = vmatpush1.msra.mxu0 0.0
    %105 = vmatprep.subr.mxu0 0.0
    %106 = vmatpush1.msra.mxu0 0.0
    %107 = vmatprep.subr.mxu0 0.0
    %108 = vmatpush1.msra.mxu0 0.0
    %109 = vmatprep.subr.mxu0 0.0
    %110 = vmatpush1.msra.mxu0 0.0
    %111 = vmatprep.subr.mxu0 0.0
    %112 = vmatpush1.msra.mxu0 0.0
    %113 = vmatprep.subr.mxu0 0.0
    %114 = vmatpush1.msra.mxu0 0.0
    %115 = vmatprep.subr.mxu0 0.0
    %116 = vmatpush1.msra.mxu0 0.0
    %117 = vmatprep.subr.mxu0 0.0
    %118 = vmatpush1.msra.mxu0 0.0
    %119 = vmatprep.subr.mxu0 0.0
    %120 = vmatpush1.msra.mxu0 0.0
    %121 = vmatprep.subr.mxu0 0.0
    %122 = vmatpush1.msra.mxu0 0.0
    %123 = vmatprep.subr.mxu0 0.0
    %124 = vmatpush1.msra.mxu0 0.0
    %125 = vmatprep.subr.mxu0 0.0
    %126 = vmatpush1.msra.mxu0 0.0
    %127 = vmatprep.subr.mxu0 0.0
    %128 = vmatpush1.msra.mxu0 0.0
    %129 = vmatprep.mubr.f32.mxu0 0.0
    %130 = vmatmul.mubr.f32.gmra.mrb[0].mxu0 %v41
    %v131 = vpop.f32.mrb[0].mxu0
    %v132 = vadd.f32 %v63, %v131
    %v133 = vpop.f32.mrb[0].mxu0
    %134 = vdwg.mxu0
    %v135 = vmax.f32 %v132, 0.0
    %s136 = scalar_lea.vmem [#allocation5], 128
    %v137 = vld [vmem:[%s136] sm:$0xff]
    %v138 = vld [vmem:[%s136 + $0x8] sm:$0xff]
    %v139 = vld [vmem:[%s136 + $0x10] sm:$0xff]
    %v140 = vld [vmem:[%s136 + $0x18] sm:$0xff]
    %v141 = vld [vmem:[%s136 + $0x20] sm:$0xff]
    %v142 = vld [vmem:[%s136 + $0x28] sm:$0xff]
    %v143 = vld [vmem:[%s136 + $0x30] sm:$0xff]
    %v144 = vld [vmem:[%s136 + $0x38] sm:$0xff]
    %v145 = vld [vmem:[%s136 + $0x40] sm:$0xff]
    %v146 = vld [vmem:[%s136 + $0x48] sm:$0xff]
    %v147 = vld [vmem:[%s136 + $0x50] sm:$0xff]
    %v148 = vld [vmem:[%s136 + $0x58] sm:$0xff]
    %v149 = vld [vmem:[%s136 + $0x60] sm:$0xff]
    %v150 = vld [vmem:[%s136 + $0x68] sm:$0xff]
    %v151 = vld [vmem:[%s136 + $0x70] sm:$0xff]
    %v152 = vld [vmem:[%s136 + $0x78] sm:$0xff]
    %s153 = scalar_lea.vmem %s2, 1
    %v154 = vld [vmem:[%s153] sm:$0x1]
    %v156 = vlaneseq
    %v157 = vshrl.u32 %v156, 7
    %v158 = vsub.s32 0, %v157
    %v159 = vrot.slane %v154, %v158
    %161 = vmatprep.subr.mxu0 0.0
    %162 = vmatpush1.msra.mxu0 %v137
    %163 = vmatprep.subr.mxu0 0.0
    %164 = vmatpush1.msra.mxu0 %v138
    %165 = vmatprep.subr.mxu0 0.0
    %166 = vmatpush1.msra.mxu0 %v139
    %167 = vmatprep.subr.mxu0 0.0
    %168 = vmatpush1.msra.mxu0 %v140
    %169 = vmatprep.subr.mxu0 0.0
    %170 = vmatpush1.msra.mxu0 %v141
    %171 = vmatprep.subr.mxu0 0.0
    %172 = vmatpush1.msra.mxu0 %v142
    %173 = vmatprep.subr.mxu0 0.0
    %174 = vmatpush1.msra.mxu0 %v143
    %175 = vmatprep.subr.mxu0 0.0
    %176 = vmatpush1.msra.mxu0 %v144
    %177 = vmatprep.subr.mxu0 0.0
    %178 = vmatpush1.msra.mxu0 %v145
    %179 = vmatprep.subr.mxu0 0.0
    %180 = vmatpush1.msra.mxu0 %v146
    %181 = vmatprep.subr.mxu0 0.0
    %182 = vmatpush1.msra.mxu0 %v147
    %183 = vmatprep.subr.mxu0 0.0
    %184 = vmatpush1.msra.mxu0 %v148
    %185 = vmatprep.subr.mxu0 0.0
    %186 = vmatpush1.msra.mxu0 %v149
    %187 = vmatprep.subr.mxu0 0.0
    %188 = vmatpush1.msra.mxu0 %v150
    %189 = vmatprep.subr.mxu0 0.0
    %190 = vmatpush1.msra.mxu0 %v151
    %191 = vmatprep.subr.mxu0 0.0
    %192 = vmatpush1.msra.mxu0 %v152
    %193 = vmatprep.subr.mxu0 0.0
    %194 = vmatpush1.msra.mxu0 0.0
    %195 = vmatprep.subr.mxu0 0.0
    %196 = vmatpush1.msra.mxu0 0.0
    %197 = vmatprep.subr.mxu0 0.0
    %198 = vmatpush1.msra.mxu0 0.0
    %199 = vmatprep.subr.mxu0 0.0
    %200 = vmatpush1.msra.mxu0 0.0
    %201 = vmatprep.subr.mxu0 0.0
    %202 = vmatpush1.msra.mxu0 0.0
    %203 = vmatprep.subr.mxu0 0.0
    %204 = vmatpush1.msra.mxu0 0.0
    %205 = vmatprep.subr.mxu0 0.0
    %206 = vmatpush1.msra.mxu0 0.0
    %207 = vmatprep.subr.mxu0 0.0
    %208 = vmatpush1.msra.mxu0 0.0
    %209 = vmatprep.subr.mxu0 0.0
    %210 = vmatpush1.msra.mxu0 0.0
    %211 = vmatprep.subr.mxu0 0.0
    %212 = vmatpush1.msra.mxu0 0.0
    %213 = vmatprep.subr.mxu0 0.0
    %214 = vmatpush1.msra.mxu0 0.0
    %215 = vmatprep.subr.mxu0 0.0
    %216 = vmatpush1.msra.mxu0 0.0
    %217 = vmatprep.subr.mxu0 0.0
    %218 = vmatpush1.msra.mxu0 0.0
    %219 = vmatprep.subr.mxu0 0.0
    %220 = vmatpush1.msra.mxu0 0.0
    %221 = vmatprep.subr.mxu0 0.0
    %222 = vmatpush1.msra.mxu0 0.0
    %223 = vmatprep.subr.mxu0 0.0
    %224 = vmatpush1.msra.mxu0 0.0
    %225 = vmatprep.mubr.f32.mxu0 0.0
    %226 = vmatmul.mubr.f32.gmra.mrb[0].mxu0 %v135
    %v227 = vpop.f32.mrb[0].mxu0
    %v228 = vadd.f32 %v159, %v227
    %v229 = vpop.f32.mrb[0].mxu0
    %230 = vdwg.mxu0
    %v231 = vmax.f32 %v228, 0.0
    %s232 = scalar_lea.vmem [#allocation5], 256
    %v233 = vld [vmem:[%s232] sm:$0xff]
    %v234 = vld [vmem:[%s232 + $0x8] sm:$0xff]
    %v235 = vld [vmem:[%s232 + $0x10] sm:$0xff]
    %v236 = vld [vmem:[%s232 + $0x18] sm:$0xff]
    %v237 = vld [vmem:[%s232 + $0x20] sm:$0xff]
    %v238 = vld [vmem:[%s232 + $0x28] sm:$0xff]
    %v239 = vld [vmem:[%s232 + $0x30] sm:$0xff]
    %v240 = vld [vmem:[%s232 + $0x38] sm:$0xff]
    %v241 = vld [vmem:[%s232 + $0x40] sm:$0xff]
    %v242 = vld [vmem:[%s232 + $0x48] sm:$0xff]
    %v243 = vld [vmem:[%s232 + $0x50] sm:$0xff]
    %v244 = vld [vmem:[%s232 + $0x58] sm:$0xff]
    %v245 = vld [vmem:[%s232 + $0x60] sm:$0xff]
    %v246 = vld [vmem:[%s232 + $0x68] sm:$0xff]
    %v247 = vld [vmem:[%s232 + $0x70] sm:$0xff]
    %v248 = vld [vmem:[%s232 + $0x78] sm:$0xff]
    %s249 = scalar_lea.vmem %s2, 2
    %v250 = vld [vmem:[%s249] sm:$0x1]
    %v252 = vlaneseq
    %v253 = vshrl.u32 %v252, 7
    %v254 = vsub.s32 0, %v253
    %v255 = vrot.slane %v250, %v254
    %257 = vmatprep.subr.mxu0 0.0
    %258 = vmatpush1.msra.mxu0 %v233
    %259 = vmatprep.subr.mxu0 0.0
    %260 = vmatpush1.msra.mxu0 %v234
    %261 = vmatprep.subr.mxu0 0.0
    %262 = vmatpush1.msra.mxu0 %v235
    %263 = vmatprep.subr.mxu0 0.0
    %264 = vmatpush1.msra.mxu0 %v236
    %265 = vmatprep.subr.mxu0 0.0
    %266 = vmatpush1.msra.mxu0 %v237
    %267 = vmatprep.subr.mxu0 0.0
    %268 = vmatpush1.msra.mxu0 %v238
    %269 = vmatprep.subr.mxu0 0.0
    %270 = vmatpush1.msra.mxu0 %v239
    %271 = vmatprep.subr.mxu0 0.0
    %272 = vmatpush1.msra.mxu0 %v240
    %273 = vmatprep.subr.mxu0 0.0
    %274 = vmatpush1.msra.mxu0 %v241
    %275 = vmatprep.subr.mxu0 0.0
    %276 = vmatpush1.msra.mxu0 %v242
    %277 = vmatprep.subr.mxu0 0.0
    %278 = vmatpush1.msra.mxu0 %v243
    %279 = vmatprep.subr.mxu0 0.0
    %280 = vmatpush1.msra.mxu0 %v244
    %281 = vmatprep.subr.mxu0 0.0
    %282 = vmatpush1.msra.mxu0 %v245
    %283 = vmatprep.subr.mxu0 0.0
    %284 = vmatpush1.msra.mxu0 %v246
    %285 = vmatprep.subr.mxu0 0.0
    %286 = vmatpush1.msra.mxu0 %v247
    %287 = vmatprep.subr.mxu0 0.0
    %288 = vmatpush1.msra.mxu0 %v248
    %289 = vmatprep.subr.mxu0 0.0
    %290 = vmatpush1.msra.mxu0 0.0
    %291 = vmatprep.subr.mxu0 0.0
    %292 = vmatpush1.msra.mxu0 0.0
    %293 = vmatprep.subr.mxu0 0.0
    %294 = vmatpush1.msra.mxu0 0.0
    %295 = vmatprep.subr.mxu0 0.0
    %296 = vmatpush1.msra.mxu0 0.0
    %297 = vmatprep.subr.mxu0 0.0
    %298 = vmatpush1.msra.mxu0 0.0
    %299 = vmatprep.subr.mxu0 0.0
    %300 = vmatpush1.msra.mxu0 0.0
    %301 = vmatprep.subr.mxu0 0.0
    %302 = vmatpush1.msra.mxu0 0.0
    %303 = vmatprep.subr.mxu0 0.0
    %304 = vmatpush1.msra.mxu0 0.0
    %305 = vmatprep.subr.mxu0 0.0
    %306 = vmatpush1.msra.mxu0 0.0
    %307 = vmatprep.subr.mxu0 0.0
    %308 = vmatpush1.msra.mxu0 0.0
    %309 = vmatprep.subr.mxu0 0.0
    %310 = vmatpush1.msra.mxu0 0.0
    %311 = vmatprep.subr.mxu0 0.0
    %312 = vmatpush1.msra.mxu0 0.0
    %313 = vmatprep.subr.mxu0 0.0
    %314 = vmatpush1.msra.mxu0 0.0
    %315 = vmatprep.subr.mxu0 0.0
    %316 = vmatpush1.msra.mxu0 0.0
    %317 = vmatprep.subr.mxu0 0.0
    %318 = vmatpush1.msra.mxu0 0.0
    %319 = vmatprep.subr.mxu0 0.0
    %320 = vmatpush1.msra.mxu0 0.0
    %321 = vmatprep.mubr.f32.mxu0 0.0
    %322 = vmatmul.mubr.f32.gmra.mrb[0].mxu0 %v231
    %v323 = vpop.f32.mrb[0].mxu0
    %v324 = vadd.f32 %v255, %v323
    %v325 = vpop.f32.mrb[0].mxu0
    %326 = vdwg.mxu0
    %v327 = vmax.f32 %v324, 0.0
    %s328 = scalar_lea.vmem [#allocation5], 384
    %v329 = vld [vmem:[%s328] sm:$0xff]
    %v330 = vld [vmem:[%s328 + $0x8] sm:$0xff]
    %v331 = vld [vmem:[%s328 + $0x10] sm:$0xff]
    %v332 = vld [vmem:[%s328 + $0x18] sm:$0xff]
    %v333 = vld [vmem:[%s328 + $0x20] sm:$0xff]
    %v334 = vld [vmem:[%s328 + $0x28] sm:$0xff]
    %v335 = vld [vmem:[%s328 + $0x30] sm:$0xff]
    %v336 = vld [vmem:[%s328 + $0x38] sm:$0xff]
    %v337 = vld [vmem:[%s328 + $0x40] sm:$0xff]
    %v338 = vld [vmem:[%s328 + $0x48] sm:$0xff]
    %v339 = vld [vmem:[%s328 + $0x50] sm:$0xff]
    %v340 = vld [vmem:[%s328 + $0x58] sm:$0xff]
    %v341 = vld [vmem:[%s328 + $0x60] sm:$0xff]
    %v342 = vld [vmem:[%s328 + $0x68] sm:$0xff]
    %v343 = vld [vmem:[%s328 + $0x70] sm:$0xff]
    %v344 = vld [vmem:[%s328 + $0x78] sm:$0xff]
    %s345 = scalar_lea.vmem %s2, 3
    %v346 = vld [vmem:[%s345] sm:$0x1]
    %v348 = vlaneseq
    %v349 = vshrl.u32 %v348, 7
    %v350 = vsub.s32 0, %v349
    %v351 = vrot.slane %v346, %v350
    %353 = vmatprep.subr.mxu0 0.0
    %354 = vmatpush1.msra.mxu0 %v329
    %355 = vmatprep.subr.mxu0 0.0
    %356 = vmatpush1.msra.mxu0 %v330
    %357 = vmatprep.subr.mxu0 0.0
    %358 = vmatpush1.msra.mxu0 %v331
    %359 = vmatprep.subr.mxu0 0.0
    %360 = vmatpush1.msra.mxu0 %v332
    %361 = vmatprep.subr.mxu0 0.0
    %362 = vmatpush1.msra.mxu0 %v333
    %363 = vmatprep.subr.mxu0 0.0
    %364 = vmatpush1.msra.mxu0 %v334
    %365 = vmatprep.subr.mxu0 0.0
    %366 = vmatpush1.msra.mxu0 %v335
    %367 = vmatprep.subr.mxu0 0.0
    %368 = vmatpush1.msra.mxu0 %v336
    %369 = vmatprep.subr.mxu0 0.0
    %370 = vmatpush1.msra.mxu0 %v337
    %371 = vmatprep.subr.mxu0 0.0
    %372 = vmatpush1.msra.mxu0 %v338
    %373 = vmatprep.subr.mxu0 0.0
    %374 = vmatpush1.msra.mxu0 %v339
    %375 = vmatprep.subr.mxu0 0.0
    %376 = vmatpush1.msra.mxu0 %v340
    %377 = vmatprep.subr.mxu0 0.0
    %378 = vmatpush1.msra.mxu0 %v341
    %379 = vmatprep.subr.mxu0 0.0
    %380 = vmatpush1.msra.mxu0 %v342
    %381 = vmatprep.subr.mxu0 0.0
    %382 = vmatpush1.msra.mxu0 %v343
    %383 = vmatprep.subr.mxu0 0.0
    %384 = vmatpush1.msra.mxu0 %v344
    %385 = vmatprep.subr.mxu0 0.0
    %386 = vmatpush1.msra.mxu0 0.0
    %387 = vmatprep.subr.mxu0 0.0
    %388 = vmatpush1.msra.mxu0 0.0
    %389 = vmatprep.subr.mxu0 0.0
    %390 = vmatpush1.msra.mxu0 0.0
    %391 = vmatprep.subr.mxu0 0.0
    %392 = vmatpush1.msra.mxu0 0.0
    %393 = vmatprep.subr.mxu0 0.0
    %394 = vmatpush1.msra.mxu0 0.0
    %395 = vmatprep.subr.mxu0 0.0
    %396 = vmatpush1.msra.mxu0 0.0
    %397 = vmatprep.subr.mxu0 0.0
    %398 = vmatpush1.msra.mxu0 0.0
    %399 = vmatprep.subr.mxu0 0.0
    %400 = vmatpush1.msra.mxu0 0.0
    %401 = vmatprep.subr.mxu0 0.0
    %402 = vmatpush1.msra.mxu0 0.0
    %403 = vmatprep.subr.mxu0 0.0
    %404 = vmatpush1.msra.mxu0 0.0
    %405 = vmatprep.subr.mxu0 0.0
    %406 = vmatpush1.msra.mxu0 0.0
    %407 = vmatprep.subr.mxu0 0.0
    %408 = vmatpush1.msra.mxu0 0.0
    %409 = vmatprep.subr.mxu0 0.0
    %410 = vmatpush1.msra.mxu0 0.0
    %411 = vmatprep.subr.mxu0 0.0
    %412 = vmatpush1.msra.mxu0 0.0
    %413 = vmatprep.subr.mxu0 0.0
    %414 = vmatpush1.msra.mxu0 0.0
    %415 = vmatprep.subr.mxu0 0.0
    %416 = vmatpush1.msra.mxu0 0.0
    %417 = vmatprep.mubr.f32.mxu0 0.0
    %418 = vmatmul.mubr.f32.gmra.mrb[0].mxu0 %v327
    %v419 = vpop.f32.mrb[0].mxu0
    %v420 = vadd.f32 %v351, %v419
    %v421 = vpop.f32.mrb[0].mxu0
    %422 = vdwg.mxu0
    %v423 = vmax.f32 %v420, 0.0
    %424 = vst [vmem:[#allocation7] sm:$0xff] %v423
    // Predicated region
    $region22: #{tpu_custom_call.1} parent=1 // pred_check
      _
    $region23: #{tpu_custom_call.1} parent=1 // pred_check_branch
      %426 = sbr.rel (0) target = $region25
    $region24: #{tpu_custom_call.1} parent=1 // pred_region
      %s428 = ssub.s32 128, 128
      %429 = vsyncadd [#allocation4], %s428
      %s431 = sshll.u32 [#allocation7], 4
      %s432 = int_to_ptr.vmem [resolvable:$true] %s431
      %434 = dma.vmem_to_hbm [thread:$0]  %s432, 128, %s3, [#allocation4]
    $region25: #{tpu_custom_call.1} parent=1 // pred_fallthru
      _
    // Predicated region
    $region26: #{tpu_custom_call.1} parent=1 // pred_check
      _
    $region27: #{tpu_custom_call.1} parent=1 // pred_check_branch
      %436 = sbr.rel (0) target = $region29
    $region28: #{tpu_custom_call.1} parent=1 // pred_region
      %437 = dma.done [#allocation4], 128
    $region29: #{tpu_custom_call.1} parent=1 // pred_fallthru
      _
    %438 = vsyncpa [#allocation3], 1
    %439 = vsyncpa [#allocation6], 1
    %440 = vsyncpa [#allocation4], 1

</llo_original>
